<compile_context>
chip_gen: v5e
topology: v5e:2x2
jax: 0.10.0
libtpu: 0.0.40
codegen_flags: <defaults>
</compile_context>

<pallas_src>
import math

import jax
import jax.numpy as jnp
from jax import lax
from jax.experimental import pallas as pl
from jax.experimental.pallas import tpu as pltpu


def _make_arcface_kernel(scale, margin, easy_margin):
    cos_m = math.cos(margin)
    sin_m = math.sin(margin)
    th = math.cos(math.pi - margin)

    def kernel(xn_ref, lab_ref, w_ref, out_ref):
        j = pl.program_id(0)
        tile_c = out_ref.shape[1]

        xn = xn_ref[...]                      # (B, E)   pre-normalized, compute dtype
        w = w_ref[...]                        # (E, tC)  pre-normalized, compute dtype
        labels = lab_ref[...]                 # (B, 1)   int32

        # cos(theta) directly: both operands are unit-norm, MXU with f32 accumulation.
        cos_theta = lax.dot_general(
            xn, w,
            dimension_numbers=(((1,), (0,)), ((), ())),
            preferred_element_type=jnp.float32,
        )                                     # (B, tC) f32

        # NaN-safe sin: clamp before sqrt (result is already <= 1 since cos^2 >= 0).
        sin_theta = jnp.sqrt(jnp.maximum(1.0 - cos_theta * cos_theta, 0.0))

        cos_theta_m = cos_theta * cos_m - sin_theta * sin_m
        if easy_margin:
            cos_theta_m = jnp.where(cos_theta > 0.0, cos_theta_m, cos_theta)
        else:
            # Matches the reference module's forward exactly (per-element sin*margin).
            cos_theta_m = jnp.where(
                cos_theta > th, cos_theta_m, cos_theta - sin_theta * margin
            )

        # Single select instead of one_hot arithmetic; class ids carry the global
        # offset of this tile so padded classes (>= C) never match a label.
        b = cos_theta.shape[0]
        class_ids = lax.broadcasted_iota(jnp.int32, (b, tile_c), 1) + j * tile_c
        out = jnp.where(class_ids == labels, cos_theta_m, cos_theta) * scale
        out_ref[...] = out.astype(out_ref.dtype)

    return kernel


def prepare_arcface_weights(weight, *, compute_dtype=jnp.bfloat16, class_tile=4096):
    """One-time (per weight update) prep: transpose, zero-pad, L2-normalize (f32), cast.

    weight: (C, E) float.  Returns a dict consumed by `arcface_apply`.
    Amortized outside the hot path — this is ~3x the HBM bytes the kernel streams,
    so re-doing it per forward call would dominate end-to-end time at large C.
    """
    C, E = weight.shape

    # Lane-dense class tiling: pad C to a multiple of 128, then to a multiple of the
    # class tile so every output block is an unmasked, dense (B, tC) store.
    c_pad = pl.cdiv(C, 128) * 128
    tc = max(128, (min(class_tile, c_pad) // 128) * 128)
    c_pad = pl.cdiv(c_pad, tc) * tc

    # Normalize rows in full precision (exactly the reference's f32 weight norm),
    # then transpose + zero-pad + cast once.  Padded columns are exactly zero, so
    # padded logits are exactly zero (and sliced off by the caller).
    w_f32 = weight.astype(jnp.float32)
    w_norm = jnp.maximum(jnp.sqrt(jnp.sum(w_f32 * w_f32, axis=1, keepdims=True)), 1e-12)
    wn = w_f32 / w_norm                                           # (C, E) f32, unit rows
    w_t = jnp.zeros((E, c_pad), dtype=compute_dtype)
    w_t = w_t.at[:, :C].set(wn.T.astype(compute_dtype))

    return {
        "w_t": w_t,
        "n_classes": C,
        "embed_dim": E,
        "c_pad": c_pad,
        "class_tile": tc,
        "compute_dtype": compute_dtype,
    }


def arcface_apply(prepared, embedd_features, gt_labels, *,
                  scale=30.0, margin=0.5, easy_margin=False):
    """ArcFace logits from prepared weights.

    embedd_features: (B, E) float, gt_labels: (B,) int.
    Returns (B, C) float32 logits (already multiplied by `scale`).
    """
    B, E = embedd_features.shape
    assert E == prepared["embed_dim"], "embedding dims must match"
    C = prepared["n_classes"]
    c_pad = prepared["c_pad"]
    tc = prepared["class_tile"]
    compute_dtype = prepared["compute_dtype"]
    w_t = prepared["w_t"]
    n_tiles = c_pad // tc

    # Hoisted, grid-invariant x-side work: normalize rows in f32, then cast once.
    # Folding 1/||x|| here removes the per-tile (B, tC) rescale multiply in the kernel
    # and keeps bf16 magnitudes <= 1.
    x_f32 = embedd_features.astype(jnp.float32)
    x_norm = jnp.maximum(jnp.sqrt(jnp.sum(x_f32 * x_f32, axis=1, keepdims=True)), 1e-12)
    xn = (x_f32 / x_norm).astype(compute_dtype)
    labels2d = gt_labels.astype(jnp.int32).reshape(B, 1)

    kernel = _make_arcface_kernel(scale, margin, easy_margin)

    out_padded = pl.pallas_call(
        kernel,
        out_shape=jax.ShapeDtypeStruct((B, c_pad), jnp.float32),
        grid=(n_tiles,),
        in_specs=[
            # xn / labels: constant block index -> resident in VMEM across class tiles.
            pl.BlockSpec((B, E), lambda j: (0, 0)),
            pl.BlockSpec((B, 1), lambda j: (0, 0)),
            # Weight stream (dominant HBM traffic), double-buffered by the pipeline.
            pl.BlockSpec((E, tc), lambda j: (0, j)),
        ],
        out_specs=pl.BlockSpec((B, tc), lambda j: (0, j)),
        compiler_params=pltpu.CompilerParams(
            # Class tiles are independent.  On multi-TC parts (v7x) this is where
            # core-sharding would engage; no-op on 1-TC chips.
            dimension_semantics=("parallel",),
            vmem_limit_bytes=32 * 1024 * 1024,
        ),
    )(xn, labels2d, w_t)

    return out_padded[:, :C]


def arcface_forward(embedd_features, weight, gt_labels, *,
                    scale=30.0, margin=0.5, easy_margin=False,
                    compute_dtype=jnp.bfloat16, class_tile=4096):
    """Convenience one-shot wrapper (prep + apply).  Production code should call
    `prepare_arcface_weights` once per weight update and reuse the result."""
    prepared = prepare_arcface_weights(
        weight, compute_dtype=compute_dtype, class_tile=class_tile)
    return arcface_apply(prepared, embedd_features, gt_labels,
                         scale=scale, margin=margin, easy_margin=easy_margin)


def reference_forward(x, w, labels, scale=30.0, margin=0.5, easy_margin=False):
    """Pure-JAX reference mirroring the PyTorch module (with the NaN-safe sqrt)."""
    cos_m, sin_m = math.cos(margin), math.sin(margin)
    th = math.cos(math.pi - margin)
    xn = x / jnp.maximum(jnp.linalg.norm(x, axis=1, keepdims=True), 1e-12)
    wn = w / jnp.maximum(jnp.linalg.norm(w, axis=1, keepdims=True), 1e-12)
    cos = xn @ wn.T
    sin = jnp.sqrt(jnp.maximum(1.0 - cos * cos, 0.0))
    cos_m_t = cos * cos_m - sin * sin_m
    if easy_margin:
        cos_m_t = jnp.where(cos > 0, cos_m_t, cos)
    else:
        cos_m_t = jnp.where(cos > th, cos_m_t, cos - sin * margin)
    one_hot = jax.nn.one_hot(labels, cos.shape[1], dtype=jnp.float32)
    return (one_hot * cos_m_t + (1.0 - one_hot) * cos) * scale


if __name__ == "__main__":
    # Module defaults: embedding_size=512, n_cls=10; small batch of 8.
    B, E, C = 8, 512, 10
    key = jax.random.PRNGKey(0)
    kx, kw, kl = jax.random.split(key, 3)

    x = jax.random.normal(kx, (B, E), dtype=jnp.float32)

    # Deterministic xavier_uniform-style init for weight of shape (n_cls, embedding_size)
    bound = math.sqrt(6.0 / (C + E))
    weight = jax.random.uniform(kw, (C, E), dtype=jnp.float32,
                                minval=-bound, maxval=bound)

    labels = jax.random.randint(kl, (B,), 0, C, dtype=jnp.int32)

    ref = reference_forward(x, weight, labels)

    # Full-precision path: tight check against the pure-JAX reference.
    prep_f32 = prepare_arcface_weights(weight, compute_dtype=jnp.float32)
    out_f32 = jax.block_until_ready(arcface_apply(prep_f32, x, labels))
    assert out_f32.shape == (B, C)
    assert jnp.allclose(out_f32, ref, atol=5e-3, rtol=1e-3), (
        "f32 path mismatch, max abs diff = "
        f"{float(jnp.max(jnp.abs(out_f32 - ref)))}")

    # Default bf16 weight/activation stream: prep once, apply (amortized hot path).
    prep_bf16 = prepare_arcface_weights(weight)          # compute_dtype=bf16 default
    out_bf16 = jax.block_until_ready(arcface_apply(prep_bf16, x, labels))
    assert out_bf16.shape == (B, C)
    max_diff = float(jnp.max(jnp.abs(out_bf16 - ref)))
    assert max_diff < 0.15, f"bf16 path mismatch, max abs diff = {max_diff}"

    print("KERNEL_OK")
</pallas_src>

<mosaic_0001>
module attributes {stable_mosaic.version = 11 : i64} {
  func.func @kernel(%arg0: i32, %arg1: memref<8x512xf32, #tpu.memory_space<vmem>>, %arg2: memref<8x1xi32, #tpu.memory_space<vmem>>, %arg3: memref<512x128xf32, #tpu.memory_space<vmem>>, %arg4: memref<8x128xf32, #tpu.memory_space<vmem>>) attributes {dimension_semantics = [#tpu.dimension_semantics<parallel>], iteration_bounds = array<i64: 1>, scalar_prefetch = 0 : i64, scratch_operands = 0 : i64, tpu.core_type = #tpu.core_type<tc>, window_params = [{pipeline_mode = #tpu.pipeline_mode<synchronous>, transform_indices = @transform_0, window_bounds = array<i64: 8, 512>}, {pipeline_mode = #tpu.pipeline_mode<synchronous>, transform_indices = @transform_1, window_bounds = array<i64: 8, 1>}, {transform_indices = @transform_2, window_bounds = array<i64: 512, 128>}, {transform_indices = @transform_3, window_bounds = array<i64: 8, 128>}]} {
    %c0 = arith.constant 0 : index
    %c0_0 = arith.constant 0 : index
    %0 = vector.load %arg1[%c0, %c0_0] : memref<8x512xf32, #tpu.memory_space<vmem>>, vector<8x512xf32>
    %c0_1 = arith.constant 0 : index
    %c0_2 = arith.constant 0 : index
    %1 = vector.load %arg3[%c0_1, %c0_2] : memref<512x128xf32, #tpu.memory_space<vmem>>, vector<512x128xf32>
    %c0_3 = arith.constant 0 : index
    %c0_4 = arith.constant 0 : index
    %2 = vector.load %arg2[%c0_3, %c0_4] : memref<8x1xi32, #tpu.memory_space<vmem>>, vector<8x1xi32>
    %cst = arith.constant dense<0.000000e+00> : vector<8x128xf32>
    %3 = tpu.matmul %0, %1, %cst {dimension_numbers = #tpu.dot_dimension_numbers<[1], [0], [0], [1], [0, 0, 1, 1], [], []>} : vector<8x512xf32>, vector<512x128xf32>, vector<8x128xf32> -> vector<8x128xf32>
    %4 = arith.mulf %3, %3 : vector<8x128xf32>
    %cst_5 = arith.constant 1.000000e+00 : f32
    %5 = vector.broadcast %cst_5 : f32 to vector<8x128xf32>
    %6 = arith.subf %5, %4 : vector<8x128xf32>
    %cst_6 = arith.constant 0.000000e+00 : f32
    %7 = vector.broadcast %cst_6 : f32 to vector<8x128xf32>
    %8 = arith.maximumf %6, %7 : vector<8x128xf32>
    %9 = math.sqrt %8 : vector<8x128xf32>
    %cst_7 = arith.constant 0.87758255 : f32
    %10 = vector.broadcast %cst_7 : f32 to vector<8x128xf32>
    %11 = arith.mulf %3, %10 : vector<8x128xf32>
    %cst_8 = arith.constant 0.47942555 : f32
    %12 = vector.broadcast %cst_8 : f32 to vector<8x128xf32>
    %13 = arith.mulf %9, %12 : vector<8x128xf32>
    %14 = arith.subf %11, %13 : vector<8x128xf32>
    %cst_9 = arith.constant -0.87758255 : f32
    %15 = vector.broadcast %cst_9 : f32 to vector<8x128xf32>
    %16 = arith.cmpf ogt, %3, %15 : vector<8x128xf32>
    %cst_10 = arith.constant 5.000000e-01 : f32
    %17 = vector.broadcast %cst_10 : f32 to vector<8x128xf32>
    %18 = arith.mulf %9, %17 : vector<8x128xf32>
    %19 = arith.subf %3, %18 : vector<8x128xf32>
    %20 = arith.select %16, %14, %19 : vector<8x128xi1>, vector<8x128xf32>
    %21 = tpu.iota {dimensions = array<i32: 1>} : vector<8x128xi32>
    %c128_i32 = arith.constant 128 : i32
    %22 = arith.muli %arg0, %c128_i32 : i32
    %23 = vector.broadcast %22 : i32 to vector<8x128xi32>
    %24 = arith.addi %21, %23 : vector<8x128xi32>
    %25 = vector.broadcast %2 : vector<8x1xi32> to vector<8x128xi32>
    %26 = arith.cmpi eq, %24, %25 : vector<8x128xi32>
    %27 = arith.select %26, %20, %3 : vector<8x128xi1>, vector<8x128xf32>
    %cst_11 = arith.constant 3.000000e+01 : f32
    %28 = vector.broadcast %cst_11 : f32 to vector<8x128xf32>
    %29 = arith.mulf %27, %28 : vector<8x128xf32>
    %c0_12 = arith.constant 0 : index
    %c0_13 = arith.constant 0 : index
    %30 = vector.load %arg4[%c0_12, %c0_13] : memref<8x128xf32, #tpu.memory_space<vmem>>, vector<8x128xf32>
    tpu.vector_store %arg4[%c0_12, %c0_13], %29 {strides = array<i32>} : memref<8x128xf32, #tpu.memory_space<vmem>>, vector<8x128xf32>,
    return
  }
  func.func @transform_0(%arg0: i32) -> (i32, i32) {
    %c0_i32 = arith.constant 0 : i32
    %c0_i32_0 = arith.constant 0 : i32
    %c0_i32_1 = arith.constant 0 : i32
    return %c0_i32, %c0_i32_0 : i32, i32
  }
  func.func @transform_1(%arg0: i32) -> (i32, i32) {
    %c0_i32 = arith.constant 0 : i32
    %c0_i32_0 = arith.constant 0 : i32
    %c0_i32_1 = arith.constant 0 : i32
    return %c0_i32, %c0_i32_0 : i32, i32
  }
  func.func @transform_2(%arg0: i32) -> (i32, i32) {
    %c0_i32 = arith.constant 0 : i32
    %c0_i32_0 = arith.constant 0 : i32
    return %c0_i32, %arg0 : i32, i32
  }
  func.func @transform_3(%arg0: i32) -> (i32, i32) {
    %c0_i32 = arith.constant 0 : i32
    %c0_i32_0 = arith.constant 0 : i32
    return %c0_i32, %arg0 : i32, i32
  }
}

</mosaic_0001>

<llo_original>
// kernel: tpu_custom_call.1
$region0: #{tpu_custom_call.1}
  #allocation0 [shape = 'u32[]', space=smem, size = 0x4, offset = 0x4, fixed_abs, tag = 'smem constant byte address 0x4 - core index']
  #allocation1 [shape = 'u32[72,128]{1,0:T(1,128)}', space=vmem, size = 0x9000, scoped, tag = 'internal scratch']
  %s0 = inlined_call_operand.hbm [shape: f32[8,512], index: 0, kind: input, shape index: {}]
  %s1 = inlined_call_operand.vmem [shape: s32[8,1], index: 1, kind: input, shape index: {}]
  %s2 = inlined_call_operand.hbm [shape: f32[512,128], index: 2, kind: input, shape index: {}]
  %s3 = inlined_call_operand.hbm [shape: f32[8,128], index: 3, kind: output, shape index: {}]
  %s4 = sld [smem:[#allocation0]]
  $region30: #{tpu_custom_call.1} parent=0
    _
  %s6 = ssub.s32 1, %s4
  %s7 = scalar_select 0, %s6, %s4
  $region1: #{tpu_custom_call.1} parent=0
    #allocation2 [shape = 'u8[16384]{0}', space=vmem, size = 0x4000, scoped, tag = 'input window, operand 0, single buffered']
    #allocation3 [shape = 's32[1]{0}', space=sflag, size = 0x4, scoped, tag = 'scoped memory for tpu_custom_call.1']
    #allocation4 [shape = 's32[1]{0}', space=sflag, size = 0x4, scoped, tag = 'scoped memory for tpu_custom_call.1']
    #allocation5 [shape = 'u8[262144]{0}', space=vmem, size = 0x40000, scoped, tag = 'input window, operand 2, single buffered']
    #allocation6 [shape = 's32[1]{0}', space=sflag, size = 0x4, scoped, tag = 'scoped memory for tpu_custom_call.1']
    #allocation7 [shape = 'u8[4096]{0}', space=vmem, size = 0x1000, scoped, tag = 'output window, operand 0, single buffered']
    %8 = vsyncpa [#allocation3], 0
    %9 = vsyncpa [#allocation6], 0
    %10 = vsyncpa [#allocation4], 0
    // Predicated region
    $region2: #{tpu_custom_call.1} parent=1 // pred_check
      _
    $region3: #{tpu_custom_call.1} parent=1 // pred_check_branch
      %12 = sbr.rel (0) target = $region5
    $region4: #{tpu_custom_call.1} parent=1 // pred_region
      %14 = vsyncadd [#allocation3], 0
      %s16 = sshll.u32 %s0, 4
      %s17 = int_to_ptr.hbm [resolvable:$true] %s16
      %s18 = sshll.u32 [#allocation2], 4
      %s19 = int_to_ptr.vmem [resolvable:$true] %s18
      %21 = dma.hbm_to_vmem [thread:$0]  %s17, 512, %s19, [#allocation3]
    $region5: #{tpu_custom_call.1} parent=1 // pred_fallthru
      _
    // Predicated region
    $region6: #{tpu_custom_call.1} parent=1 // pred_check
      _
    $region7: #{tpu_custom_call.1} parent=1 // pred_check_branch
      %23 = sbr.rel (0) target = $region9
    $region8: #{tpu_custom_call.1} parent=1 // pred_region
      _
    $region9: #{tpu_custom_call.1} parent=1 // pred_fallthru
      _
    // Predicated region
    $region10: #{tpu_custom_call.1} parent=1 // pred_check
      _
    $region11: #{tpu_custom_call.1} parent=1 // pred_check_branch
      %25 = sbr.rel (0) target = $region13
    $region12: #{tpu_custom_call.1} parent=1 // pred_region
      %27 = vsyncadd [#allocation6], 0
      %s28 = sshll.u32 %s2, 4
      %s29 = int_to_ptr.hbm [resolvable:$true] %s28
      %s30 = sshll.u32 [#allocation5], 4
      %s31 = int_to_ptr.vmem [resolvable:$true] %s30
      %36 = dma.hbm_to_vmem [thread:$0]  %s29, 8192, %s31, [#allocation6], 128, 128, 8
    $region13: #{tpu_custom_call.1} parent=1 // pred_fallthru
      _
    // Predicated region
    $region14: #{tpu_custom_call.1} parent=1 // pred_check
      _
    $region15: #{tpu_custom_call.1} parent=1 // pred_check_branch
      %38 = sbr.rel (0) target = $region17
    $region16: #{tpu_custom_call.1} parent=1 // pred_region
      %40 = dma.done [#allocation3], 512
    $region17: #{tpu_custom_call.1} parent=1 // pred_fallthru
      _
    // Predicated region
    $region18: #{tpu_custom_call.1} parent=1 // pred_check
      _
    $region19: #{tpu_custom_call.1} parent=1 // pred_check_branch
      %42 = sbr.rel (0) target = $region21
    $region20: #{tpu_custom_call.1} parent=1 // pred_region
      %44 = dma.done [#allocation6], 8192
    $region21: #{tpu_custom_call.1} parent=1 // pred_fallthru
      _
    %v45 = vld [vmem:[#allocation2] sm:$0xff]
    %v46 = vld [vmem:[#allocation2 + $0x8] sm:$0xff]
    %v47 = vld [vmem:[#allocation2 + $0x10] sm:$0xff]
    %v48 = vld [vmem:[#allocation2 + $0x18] sm:$0xff]
    %v49 = vld [vmem:[#allocation5] sm:$0xff]
    %v50 = vld [vmem:[#allocation5 + $0x8] sm:$0xff]
    %v51 = vld [vmem:[#allocation5 + $0x10] sm:$0xff]
    %v52 = vld [vmem:[#allocation5 + $0x18] sm:$0xff]
    %v53 = vld [vmem:[#allocation5 + $0x20] sm:$0xff]
    %v54 = vld [vmem:[#allocation5 + $0x28] sm:$0xff]
    %v55 = vld [vmem:[#allocation5 + $0x30] sm:$0xff]
    %v56 = vld [vmem:[#allocation5 + $0x38] sm:$0xff]
    %v57 = vld [vmem:[#allocation5 + $0x40] sm:$0xff]
    %v58 = vld [vmem:[#allocation5 + $0x48] sm:$0xff]
    %v59 = vld [vmem:[#allocation5 + $0x50] sm:$0xff]
    %v60 = vld [vmem:[#allocation5 + $0x58] sm:$0xff]
    %v61 = vld [vmem:[#allocation5 + $0x60] sm:$0xff]
    %v62 = vld [vmem:[#allocation5 + $0x68] sm:$0xff]
    %v63 = vld [vmem:[#allocation5 + $0x70] sm:$0xff]
    %v64 = vld [vmem:[#allocation5 + $0x78] sm:$0xff]
    %v65 = vld [vmem:[#allocation5 + $0x80] sm:$0xff]
    %v66 = vld [vmem:[#allocation5 + $0x88] sm:$0xff]
    %v67 = vld [vmem:[#allocation5 + $0x90] sm:$0xff]
    %v68 = vld [vmem:[#allocation5 + $0x98] sm:$0xff]
    %v69 = vld [vmem:[#allocation5 + $0xa0] sm:$0xff]
    %v70 = vld [vmem:[#allocation5 + $0xa8] sm:$0xff]
    %v71 = vld [vmem:[#allocation5 + $0xb0] sm:$0xff]
    %v72 = vld [vmem:[#allocation5 + $0xb8] sm:$0xff]
    %v73 = vld [vmem:[#allocation5 + $0xc0] sm:$0xff]
    %v74 = vld [vmem:[#allocation5 + $0xc8] sm:$0xff]
    %v75 = vld [vmem:[#allocation5 + $0xd0] sm:$0xff]
    %v76 = vld [vmem:[#allocation5 + $0xd8] sm:$0xff]
    %v77 = vld [vmem:[#allocation5 + $0xe0] sm:$0xff]
    %v78 = vld [vmem:[#allocation5 + $0xe8] sm:$0xff]
    %v79 = vld [vmem:[#allocation5 + $0xf0] sm:$0xff]
    %v80 = vld [vmem:[#allocation5 + $0xf8] sm:$0xff]
    %v81 = vld [vmem:[#allocation5 + $0x100] sm:$0xff]
    %v82 = vld [vmem:[#allocation5 + $0x108] sm:$0xff]
    %v83 = vld [vmem:[#allocation5 + $0x110] sm:$0xff]
    %v84 = vld [vmem:[#allocation5 + $0x118] sm:$0xff]
    %v85 = vld [vmem:[#allocation5 + $0x120] sm:$0xff]
    %v86 = vld [vmem:[#allocation5 + $0x128] sm:$0xff]
    %v87 = vld [vmem:[#allocation5 + $0x130] sm:$0xff]
    %v88 = vld [vmem:[#allocation5 + $0x138] sm:$0xff]
    %v89 = vld [vmem:[#allocation5 + $0x140] sm:$0xff]
    %v90 = vld [vmem:[#allocation5 + $0x148] sm:$0xff]
    %v91 = vld [vmem:[#allocation5 + $0x150] sm:$0xff]
    %v92 = vld [vmem:[#allocation5 + $0x158] sm:$0xff]
    %v93 = vld [vmem:[#allocation5 + $0x160] sm:$0xff]
    %v94 = vld [vmem:[#allocation5 + $0x168] sm:$0xff]
    %v95 = vld [vmem:[#allocation5 + $0x170] sm:$0xff]
    %v96 = vld [vmem:[#allocation5 + $0x178] sm:$0xff]
    %v97 = vld [vmem:[#allocation5 + $0x180] sm:$0xff]
    %v98 = vld [vmem:[#allocation5 + $0x188] sm:$0xff]
    %v99 = vld [vmem:[#allocation5 + $0x190] sm:$0xff]
    %v100 = vld [vmem:[#allocation5 + $0x198] sm:$0xff]
    %v101 = vld [vmem:[#allocation5 + $0x1a0] sm:$0xff]
    %v102 = vld [vmem:[#allocation5 + $0x1a8] sm:$0xff]
    %v103 = vld [vmem:[#allocation5 + $0x1b0] sm:$0xff]
    %v104 = vld [vmem:[#allocation5 + $0x1b8] sm:$0xff]
    %v105 = vld [vmem:[#allocation5 + $0x1c0] sm:$0xff]
    %v106 = vld [vmem:[#allocation5 + $0x1c8] sm:$0xff]
    %v107 = vld [vmem:[#allocation5 + $0x1d0] sm:$0xff]
    %v108 = vld [vmem:[#allocation5 + $0x1d8] sm:$0xff]
    %v109 = vld [vmem:[#allocation5 + $0x1e0] sm:$0xff]
    %v110 = vld [vmem:[#allocation5 + $0x1e8] sm:$0xff]
    %v111 = vld [vmem:[#allocation5 + $0x1f0] sm:$0xff]
    %v112 = vld [vmem:[#allocation5 + $0x1f8] sm:$0xff]
    %v113 = vld [vmem:[%s1] sm:$0xff]
    %114 = vmatpush.msra.mxu0 %v64
    %115 = vmatpush.msra.mxu0 %v63
    %116 = vmatpush.msra.mxu0 %v62
    %117 = vmatpush.msra.mxu0 %v61
    %118 = vmatpush.msra.mxu0 %v60
    %119 = vmatpush.msra.mxu0 %v59
    %120 = vmatpush.msra.mxu0 %v58
    %121 = vmatpush.msra.mxu0 %v57
    %122 = vmatpush.msra.mxu0 %v56
    %123 = vmatpush.msra.mxu0 %v55
    %124 = vmatpush.msra.mxu0 %v54
    %125 = vmatpush.msra.mxu0 %v53
    %126 = vmatpush.msra.mxu0 %v52
    %127 = vmatpush.msra.mxu0 %v51
    %128 = vmatpush.msra.mxu0 %v50
    %129 = vmatpush.msra.mxu0 %v49
    %130 = vmatmul.f32.gmra.mxu0 %v45
    %v131 = vpop.f32.mrf.mxu0
    %v132 = vadd.f32 0.0, %v131
    %133 = vdwg.mxu0
    %134 = vmatpush.msra.mxu0 %v80
    %135 = vmatpush.msra.mxu0 %v79
    %136 = vmatpush.msra.mxu0 %v78
    %137 = vmatpush.msra.mxu0 %v77
    %138 = vmatpush.msra.mxu0 %v76
    %139 = vmatpush.msra.mxu0 %v75
    %140 = vmatpush.msra.mxu0 %v74
    %141 = vmatpush.msra.mxu0 %v73
    %142 = vmatpush.msra.mxu0 %v72
    %143 = vmatpush.msra.mxu0 %v71
    %144 = vmatpush.msra.mxu0 %v70
    %145 = vmatpush.msra.mxu0 %v69
    %146 = vmatpush.msra.mxu0 %v68
    %147 = vmatpush.msra.mxu0 %v67
    %148 = vmatpush.msra.mxu0 %v66
    %149 = vmatpush.msra.mxu0 %v65
    %150 = vmatmul.f32.gmra.mxu0 %v46
    %v151 = vpop.f32.mrf.mxu0
    %v152 = vadd.f32 %v132, %v151
    %153 = vdwg.mxu0
    %154 = vmatpush.msra.mxu0 %v96
    %155 = vmatpush.msra.mxu0 %v95
    %156 = vmatpush.msra.mxu0 %v94
    %157 = vmatpush.msra.mxu0 %v93
    %158 = vmatpush.msra.mxu0 %v92
    %159 = vmatpush.msra.mxu0 %v91
    %160 = vmatpush.msra.mxu0 %v90
    %161 = vmatpush.msra.mxu0 %v89
    %162 = vmatpush.msra.mxu0 %v88
    %163 = vmatpush.msra.mxu0 %v87
    %164 = vmatpush.msra.mxu0 %v86
    %165 = vmatpush.msra.mxu0 %v85
    %166 = vmatpush.msra.mxu0 %v84
    %167 = vmatpush.msra.mxu0 %v83
    %168 = vmatpush.msra.mxu0 %v82
    %169 = vmatpush.msra.mxu0 %v81
    %170 = vmatmul.f32.gmra.mxu0 %v47
    %v171 = vpop.f32.mrf.mxu0
    %v172 = vadd.f32 %v152, %v171
    %173 = vdwg.mxu0
    %174 = vmatpush.msra.mxu0 %v112
    %175 = vmatpush.msra.mxu0 %v111
    %176 = vmatpush.msra.mxu0 %v110
    %177 = vmatpush.msra.mxu0 %v109
    %178 = vmatpush.msra.mxu0 %v108
    %179 = vmatpush.msra.mxu0 %v107
    %180 = vmatpush.msra.mxu0 %v106
    %181 = vmatpush.msra.mxu0 %v105
    %182 = vmatpush.msra.mxu0 %v104
    %183 = vmatpush.msra.mxu0 %v103
    %184 = vmatpush.msra.mxu0 %v102
    %185 = vmatpush.msra.mxu0 %v101
    %186 = vmatpush.msra.mxu0 %v100
    %187 = vmatpush.msra.mxu0 %v99
    %188 = vmatpush.msra.mxu0 %v98
    %189 = vmatpush.msra.mxu0 %v97
    %190 = vmatmul.f32.gmra.mxu0 %v48
    %v191 = vpop.f32.mrf.mxu0
    %v192 = vadd.f32 %v172, %v191
    %193 = vdwg.mxu0
    %v194 = vmul.f32 %v192, %v192
    %v195 = vsub.f32 1.0, %v194
    %v196 = vmax.f32 %v195, 0.0
    %v197 = vrsqrt.pop %v196
    %v198 = vmul.f32 %v197, %v196
    %v199 = vmul.f32 %v198, %v197
    %v200 = vmul.f32 0.5, %v199
    %v201 = vsub.f32 1.5, %v200
    %v202 = vmul.f32 %v197, %v201
    %v203 = vmul.f32 %v196, %v202
    %vm204 = vcmp.eq.f32.partialorder %v196, inf
    %v205 = vsel %vm204, %v196, %v203
    %vm206 = vcmp.eq.f32.partialorder %v196, 0.0
    %v207 = vand.u32 %v196, 2147483648
    %v208 = vsel %vm206, %v207, %v205
    %v209 = vmul.f32 %v192, 0.87758255
    %v210 = vmul.f32 %v208, 0.47942555
    %v211 = vsub.f32 %v209, %v210
    %vm212 = vcmp.gt.f32.partialorder %v192, -0.87758255
    %v213 = vmul.f32 %v208, 0.5
    %v214 = vsub.f32 %v192, %v213
    %v215 = vsel %vm212, %v211, %v214
    %v216 = vlaneseq
    %v217 = vand.u32 %v216, 127
    %s218 = smul.u32 0, 128
    %v219 = vstv %s218
    %v220 = vadd.s32 %v217, %v219
    %221 = vset.pattern.permute.xlu0 0
    %222 = vperm.xlu0 %221, %v113
    %v223 = vpop.permute.xlu0 %222
    %vm224 = vcmp.eq.s32.totalorder %v220, %v223
    %v225 = vsel %vm224, %v215, %v192
    %v226 = vmul.f32 %v225, 30.0
    %227 = vst [vmem:[#allocation7] sm:$0xff] %v226
    // Predicated region
    $region22: #{tpu_custom_call.1} parent=1 // pred_check
      _
    $region23: #{tpu_custom_call.1} parent=1 // pred_check_branch
      %229 = sbr.rel (0) target = $region25
    $region24: #{tpu_custom_call.1} parent=1 // pred_region
      %231 = vsyncadd [#allocation4], 0
      %s233 = sshll.u32 [#allocation7], 4
      %s234 = int_to_ptr.vmem [resolvable:$true] %s233
      %s235 = sshll.u32 %s3, 4
      %s236 = int_to_ptr.hbm [resolvable:$true] %s235
      %238 = dma.vmem_to_hbm [thread:$0]  %s234, 128, %s236, [#allocation4]
    $region25: #{tpu_custom_call.1} parent=1 // pred_fallthru
      _
    // Predicated region
    $region26: #{tpu_custom_call.1} parent=1 // pred_check
      _
    $region27: #{tpu_custom_call.1} parent=1 // pred_check_branch
      %240 = sbr.rel (0) target = $region29
    $region28: #{tpu_custom_call.1} parent=1 // pred_region
      %242 = dma.done [#allocation4], 128
    $region29: #{tpu_custom_call.1} parent=1 // pred_fallthru
      _
    %243 = vsyncpa [#allocation3], 1
    %244 = vsyncpa [#allocation6], 1
    %245 = vsyncpa [#allocation4], 1

</llo_original>
